<compile_context>
chip_gen: v5e
topology: v5e:2x2
jax: 0.10.0
libtpu: 0.0.40
codegen_flags: <defaults>
</compile_context>

<pallas_src>
import jax
import jax.numpy as jnp
from jax.experimental import pallas as pl
from jax.experimental.pallas import tpu as pltpu


def _gcn_fused_kernel(x_ref, w_ref, b_ref, o_ref):
    # x_ref: (B_blk, C, TL)  input slab (compute dtype, e.g. bf16)
    # w_ref: (C, C)          fused weight  W_eff = w2 @ (w1 - I)
    # b_ref: (C, 1)          fused bias    b_eff = w2 @ b1
    # o_ref: (B_blk, C, TL)  output slab (original x dtype)
    w = w_ref[...]
    b = b_ref[...]
    for i in range(x_ref.shape[0]):           # static unroll over the batch tile
        h = jnp.dot(w, x_ref[i], preferred_element_type=jnp.float32)
        o_ref[i] = jnp.maximum(h + b, 0.0).astype(o_ref.dtype)


def _vmem_limit_bytes():
    """Generation-aware scoped-VMEM limit (~3/4 of physical, capped)."""
    cap = 64 * 1024 * 1024                     # conservative default (v7x per-TC)
    try:
        info = pltpu.get_tpu_info()
        cap = int(getattr(info, "vmem_capacity_bytes", cap))
    except Exception:
        pass
    return min((cap * 3) // 4, 96 * 1024 * 1024)


def _pick_tiles(B, C, L, in_itemsize, out_itemsize, pipeline_budget_bytes):
    """Choose (B_blk, TL) so the double-buffered footprint (2x in + 2x out
    blocks) fits the budget, TL stays lane-dense (multiple of 128 or full L),
    and there are enough grid steps to pipeline DMAs / feed both v7x cores."""
    per_pos = C * (2 * in_itemsize + 2 * out_itemsize)    # bytes per (b, l) position
    max_pos = max(128, pipeline_budget_bytes // per_pos)  # budget for B_blk * TL

    if L <= 128:
        tl = L                                  # full-extent block: always legal
    else:
        tl = min(L, max_pos)
        tl = max(128, (tl // 128) * 128)        # lane-dense
    b_blk = int(max(1, min(B, max_pos // tl)))

    # Ensure >= 4 parallel grid steps when the problem allows it.
    while pl.cdiv(B, b_blk) * pl.cdiv(L, tl) < 4:
        if b_blk > 1:
            b_blk = max(1, b_blk // 2)
        elif tl > 128:
            new_tl = max(128, (pl.cdiv(tl, 2) // 128) * 128)
            if new_tl == tl:
                break
            tl = new_tl
        else:
            break
    return b_blk, tl


def gcn_forward(x, w1, b1, w2, *, compute_dtype=jnp.bfloat16):
    """x: (B, C, L); w1, w2: (C, C); b1: (C,). Returns (B, C, L) in x.dtype."""
    B, C, L = x.shape
    assert w1.shape == (C, C) and w2.shape == (C, C), (
        "GCN fusion assumes num_state == num_node (square 1x1 convs)")

    # Algebraic fusion in f32 on tiny (C, C) operands.
    eye = jnp.eye(C, dtype=jnp.float32)
    w_eff = jnp.dot(w2.astype(jnp.float32), w1.astype(jnp.float32) - eye)
    b_eff = jnp.dot(w2.astype(jnp.float32), b1.astype(jnp.float32)).reshape(C, 1)

    # bf16 streaming (MXU-native on v5e/v6e/v7x); f32 accumulation in-kernel.
    x_c = x.astype(compute_dtype)
    w_c = w_eff.astype(compute_dtype)
    b_c = b_eff.astype(compute_dtype)

    out_dtype = x.dtype
    in_itemsize = jnp.dtype(compute_dtype).itemsize
    out_itemsize = jnp.dtype(out_dtype).itemsize

    vmem_limit = _vmem_limit_bytes()
    pipeline_budget = max(vmem_limit - 4 * 1024 * 1024, 8 * 1024 * 1024)
    b_blk, tl = _pick_tiles(B, C, L, in_itemsize, out_itemsize, pipeline_budget)

    nb = pl.cdiv(B, b_blk)
    nl = pl.cdiv(L, tl)

    # Put the better-populated parallel axis first (v7x megacore sharding).
    if nl >= nb:
        grid = (nl, nb)
        data_map = lambda l, b: (b, 0, l)
    else:
        grid = (nb, nl)
        data_map = lambda b, l: (b, 0, l)
    const_map = lambda i, j: (0, 0)

    flops = 2 * B * C * C * L + 2 * B * C * L               # matmul + bias/relu
    bytes_accessed = (
        B * C * L * (in_itemsize + out_itemsize)            # x in + out
        + C * C * in_itemsize + C * in_itemsize)            # fused weight + bias

    return pl.pallas_call(
        _gcn_fused_kernel,
        out_shape=jax.ShapeDtypeStruct((B, C, L), out_dtype),
        grid_spec=pltpu.PrefetchScalarGridSpec(
            num_scalar_prefetch=0,
            grid=grid,
            in_specs=[
                pl.BlockSpec((b_blk, C, tl), data_map),      # x slab (lane-dense)
                pl.BlockSpec((C, C), const_map),             # fused weight, VMEM-resident
                pl.BlockSpec((C, 1), const_map),             # fused bias
            ],
            out_specs=pl.BlockSpec((b_blk, C, tl), data_map),
        ),
        compiler_params=pltpu.CompilerParams(
            dimension_semantics=("parallel", "parallel"),
            vmem_limit_bytes=vmem_limit,
        ),
        cost_estimate=pl.CostEstimate(
            flops=flops, transcendentals=0, bytes_accessed=bytes_accessed),
    )(x_c, w_c, b_c)


def gcn_reference(x, w1, b1, w2):
    # Pure-JAX f32 reference of the (unfused) PyTorch forward.
    h = jnp.einsum("oi,bil->bol", w1, x) + b1[None, :, None]
    h = h - x
    h = jnp.einsum("oi,bil->bol", w2, h)
    return jnp.maximum(h, 0.0)


if __name__ == "__main__":
    # Small shapes consistent with the module: num_state == num_node == 32.
    B, C, L = 2, 32, 512   # batch, channels (num_state = num_node), sequence

    key = jax.random.PRNGKey(0)
    kx, kw1, kb1, kw2 = jax.random.split(key, 4)

    x = jax.random.normal(kx, (B, C, L), dtype=jnp.float32)
    w1 = jax.random.normal(kw1, (C, C), dtype=jnp.float32) * (1.0 / jnp.sqrt(C))
    b1 = jax.random.normal(kb1, (C,), dtype=jnp.float32) * 0.01
    w2 = jax.random.normal(kw2, (C, C), dtype=jnp.float32) * (1.0 / jnp.sqrt(C))

    out = jax.block_until_ready(gcn_forward(x, w1, b1, w2))

    ref = gcn_reference(x, w1, b1, w2)
    assert out.shape == (B, C, L) and out.dtype == x.dtype
    # Differences come from fp reassociation of the fusion plus bf16 streaming
    # quantization of x / fused weights; stays well within this tolerance.
    assert jnp.allclose(out, ref, atol=7.5e-2, rtol=7.5e-2), "mismatch vs reference"

    print("KERNEL_OK")
</pallas_src>

<mosaic_0001>
module attributes {stable_mosaic.version = 11 : i64} {
  func.func @_gcn_fused_kernel(%arg0: i32, %arg1: i32, %arg2: memref<1x32x256xbf16, #tpu.memory_space<vmem>>, %arg3: memref<32x32xbf16, #tpu.memory_space<vmem>>, %arg4: memref<32x1xbf16, #tpu.memory_space<vmem>>, %arg5: memref<1x32x256xf32, #tpu.memory_space<vmem>>) attributes {dimension_semantics = [#tpu.dimension_semantics<parallel>, #tpu.dimension_semantics<parallel>], iteration_bounds = array<i64: 2, 2>, scalar_prefetch = 0 : i64, scratch_operands = 0 : i64, tpu.core_type = #tpu.core_type<tc>, window_params = [{transform_indices = @transform_0, window_bounds = array<i64: 1, 32, 256>}, {pipeline_mode = #tpu.pipeline_mode<synchronous>, transform_indices = @transform_1, window_bounds = array<i64: 32, 32>}, {pipeline_mode = #tpu.pipeline_mode<synchronous>, transform_indices = @transform_2, window_bounds = array<i64: 32, 1>}, {transform_indices = @transform_3, window_bounds = array<i64: 1, 32, 256>}]} {
    %c0 = arith.constant 0 : index
    %c0_0 = arith.constant 0 : index
    %0 = vector.load %arg3[%c0, %c0_0] : memref<32x32xbf16, #tpu.memory_space<vmem>>, vector<32x32xbf16>
    %c0_1 = arith.constant 0 : index
    %c0_2 = arith.constant 0 : index
    %1 = vector.load %arg4[%c0_1, %c0_2] : memref<32x1xbf16, #tpu.memory_space<vmem>>, vector<32x1xbf16>
    %c0_3 = arith.constant 0 : index
    %c0_4 = arith.constant 0 : index
    %c0_5 = arith.constant 0 : index
    %2 = vector.load %arg2[%c0_3, %c0_4, %c0_5] : memref<1x32x256xbf16, #tpu.memory_space<vmem>>, vector<1x32x256xbf16>
    %3 = vector.shape_cast %2 : vector<1x32x256xbf16> to vector<32x256xbf16>
    %cst = arith.constant dense<0.000000e+00> : vector<32x256xf32>
    %4 = tpu.matmul %0, %3, %cst {dimension_numbers = #tpu.dot_dimension_numbers<[1], [0], [0], [1], [0, 0, 1, 1], [], []>} : vector<32x32xbf16>, vector<32x256xbf16>, vector<32x256xf32> -> vector<32x256xf32>
    %5 = arith.extf %1 : vector<32x1xbf16> to vector<32x1xf32>
    %6 = vector.broadcast %5 : vector<32x1xf32> to vector<32x256xf32>
    %7 = arith.addf %4, %6 : vector<32x256xf32>
    %cst_6 = arith.constant 0.000000e+00 : f32
    %8 = vector.broadcast %cst_6 : f32 to vector<32x256xf32>
    %9 = arith.maximumf %7, %8 : vector<32x256xf32>
    %c0_7 = arith.constant 0 : index
    %c0_8 = arith.constant 0 : index
    %c0_9 = arith.constant 0 : index
    %10 = vector.load %arg5[%c0_7, %c0_8, %c0_9] : memref<1x32x256xf32, #tpu.memory_space<vmem>>, vector<1x32x256xf32>
    %11 = vector.shape_cast %10 : vector<1x32x256xf32> to vector<32x256xf32>
    %12 = vector.shape_cast %9 : vector<32x256xf32> to vector<1x32x256xf32>
    tpu.vector_store %arg5[%c0_7, %c0_8, %c0_9], %12 {strides = array<i32>} : memref<1x32x256xf32, #tpu.memory_space<vmem>>, vector<1x32x256xf32>,
    return
  }
  func.func @transform_0(%arg0: i32, %arg1: i32) -> (i32, i32, i32) {
    %c0_i32 = arith.constant 0 : i32
    %c0_i32_0 = arith.constant 0 : i32
    return %arg1, %c0_i32, %arg0 : i32, i32, i32
  }
  func.func @transform_1(%arg0: i32, %arg1: i32) -> (i32, i32) {
    %c0_i32 = arith.constant 0 : i32
    %c0_i32_0 = arith.constant 0 : i32
    %c0_i32_1 = arith.constant 0 : i32
    return %c0_i32, %c0_i32_0 : i32, i32
  }
  func.func @transform_2(%arg0: i32, %arg1: i32) -> (i32, i32) {
    %c0_i32 = arith.constant 0 : i32
    %c0_i32_0 = arith.constant 0 : i32
    %c0_i32_1 = arith.constant 0 : i32
    return %c0_i32, %c0_i32_0 : i32, i32
  }
  func.func @transform_3(%arg0: i32, %arg1: i32) -> (i32, i32, i32) {
    %c0_i32 = arith.constant 0 : i32
    %c0_i32_0 = arith.constant 0 : i32
    return %arg1, %c0_i32, %arg0 : i32, i32, i32
  }
}

</mosaic_0001>

<llo_original>
// kernel: tpu_custom_call.1
$region0: #{tpu_custom_call.1}
  #allocation0 [shape = 'u32[]', space=smem, size = 0x4, offset = 0x4, fixed_abs, tag = 'smem constant byte address 0x4 - core index']
  #allocation1 [shape = 'u32[72,128]{1,0:T(1,128)}', space=vmem, size = 0x9000, scoped, tag = 'internal scratch']
  %s0 = inlined_call_operand.hbm [shape: bf16[2,32,512], index: 0, kind: input, shape index: {}]
  %s1 = inlined_call_operand.vmem [shape: bf16[32,32], index: 1, kind: input, shape index: {}]
  %s2 = inlined_call_operand.vmem [shape: bf16[32,1], index: 2, kind: input, shape index: {}]
  %s3 = inlined_call_operand.hbm [shape: f32[2,32,512], index: 3, kind: output, shape index: {}]
  %s4 = sld [smem:[#allocation0]]
  $region49: #{tpu_custom_call.1} parent=0
    _
  %s6 = ssub.s32 1, %s4
  %s7 = scalar_select 0, %s6, %s4
  $region1: #{tpu_custom_call.1} parent=0
    #allocation2 [shape = 'u8[32768]{0}', space=vmem, size = 0x8000, scoped, tag = 'input window, operand 0']
    #allocation3 [shape = 's32[2]{0}', space=sflag, size = 0x8, scoped, tag = 'scoped memory for tpu_custom_call.1']
    #allocation4 [shape = 's32[2]{0}', space=sflag, size = 0x8, scoped, tag = 'scoped memory for tpu_custom_call.1']
    #allocation5 [shape = 'u8[65536]{0}', space=vmem, size = 0x10000, scoped, tag = 'output window, operand 0']
    %8 = vsyncpa [#allocation3], 0
    %s9 = scalar_lea.sflag [#allocation3], 1
    %10 = vsyncpa %s9, 0
    %11 = vsyncpa [#allocation4], 0
    %s12 = scalar_lea.sflag [#allocation4], 1
    %13 = vsyncpa %s12, 0
    loop: start=0, step=1, limit=6
    $region2: #{tpu_custom_call.1} parent=1 // loop_pre_header
      _
    $region3: #{tpu_custom_call.1} parent=1 // loop_header
      %s15 = sphi 0, %s19
      %p16 = scmp.ge.s32.totalorder %s15, 6
      %s22 = sphi 0, %s34
      %s23 = sphi 0, %s30
      %s24 = sphi 0, %s22
      %s25 = sphi 0, %s23
      %s26 = sphi 0, %s24
      %s27 = sphi 0, %s25
      %s39 = sphi 0, %s41
      %s42 = sphi 0, %s39
      %s43 = sphi 0, %s42
      %s59 = sphi 0, %s43
      %s63 = sphi 0, %s63
      %s65 = sphi 0, %s63
      %s66 = sphi 0, %s65
      %s80 = sphi 0, %s66
      %s84 = sphi 0, %s84
      %s86 = sphi 0, %s84
      %s87 = sphi 0, %s86
      %s101 = sphi 0, %s87
      %s109 = sphi 0, %s111
      %s112 = sphi 0, %s109
      %s113 = sphi 0, %s112
      %s129 = sphi 0, %s113
    $region4: #{tpu_custom_call.1} parent=1 // loop_header_branch
      %18 = sbr.rel (%p16) target = $region8
    $region5: #{tpu_custom_call.1} parent=1 // loop_body
      %s20 = ssub.s32 %s15, 1
      %s21 = ssub.s32 %s15, 2
      %s28 = sadd.s32 1, %s23
      %p29 = scmp.ge.s32.totalorder %s28, 2
      %s30 = scalar_select %p29, 0, %s28
      %s31 = sadd.s32 1, %s22
      %s32 = scalar_select %p29, %s31, %s22
      %p33 = scmp.ge.s32.totalorder %s32, 2
      %s34 = scalar_select %p33, 0, %s32
      %s35 = ssub.s32 %s23, %s30
      %s36 = ssub.s32 %s22, %s34
      %s37 = sor.u32 %s35, %s36
      %p38 = scmp.eq.s32.totalorder %s37, 0
      %s40 = sadd.s32 %s39, 1
      %s41 = scalar_select %p38, %s39, %s40
      %p44 = pneg %p38
      %p45 = scmp.eq.s32.totalorder %s15, 3
      %p46 = por %p44, %p45
      %p47 = scmp.ne.s32.totalorder %s39, %s42
      %p48 = scmp.eq.s32.totalorder %s15, 0
      %p49 = por %p47, %p48
      %p50 = scmp.ne.s32.totalorder %s39, %s42
      %p51 = scmp.eq.s32.totalorder %s20, 3
      %p52 = por %p50, %p51
      %p53 = scmp.ne.s32.totalorder %s42, %s43
      %p54 = scmp.eq.s32.totalorder %s20, 0
      %p55 = por %p53, %p54
      %p56 = scmp.ne.s32.totalorder %s42, %s43
      %p57 = scmp.eq.s32.totalorder %s21, 3
      %p58 = por %p56, %p57
      %p60 = scmp.ne.s32.totalorder %s43, %s59
      %p61 = scmp.eq.s32.totalorder %s21, 0
      %p62 = por %p60, %p61
      %s64 = sadd.s32 %s63, 1
      %p67 = scmp.eq.s32.totalorder %s15, 3
      %p68 = scmp.ne.s32.totalorder %s63, %s65
      %p69 = scmp.eq.s32.totalorder %s15, 0
      %p70 = por %p68, %p69
      %p71 = scmp.ne.s32.totalorder %s63, %s65
      %p72 = scmp.eq.s32.totalorder %s20, 3
      %p73 = por %p71, %p72
      %p74 = scmp.ne.s32.totalorder %s65, %s66
      %p75 = scmp.eq.s32.totalorder %s20, 0
      %p76 = por %p74, %p75
      %p77 = scmp.ne.s32.totalorder %s65, %s66
      %p78 = scmp.eq.s32.totalorder %s21, 3
      %p79 = por %p77, %p78
      %p81 = scmp.ne.s32.totalorder %s66, %s80
      %p82 = scmp.eq.s32.totalorder %s21, 0
      %p83 = por %p81, %p82
      %s85 = sadd.s32 %s84, 1
      %p88 = scmp.eq.s32.totalorder %s15, 3
      %p89 = scmp.ne.s32.totalorder %s84, %s86
      %p90 = scmp.eq.s32.totalorder %s15, 0
      %p91 = por %p89, %p90
      %p92 = scmp.ne.s32.totalorder %s84, %s86
      %p93 = scmp.eq.s32.totalorder %s20, 3
      %p94 = por %p92, %p93
      %p95 = scmp.ne.s32.totalorder %s86, %s87
      %p96 = scmp.eq.s32.totalorder %s20, 0
      %p97 = por %p95, %p96
      %p98 = scmp.ne.s32.totalorder %s86, %s87
      %p99 = scmp.eq.s32.totalorder %s21, 3
      %p100 = por %p98, %p99
      %p102 = scmp.ne.s32.totalorder %s87, %s101
      %p103 = scmp.eq.s32.totalorder %s21, 0
      %p104 = por %p102, %p103
      %s105 = ssub.s32 %s23, %s30
      %s106 = ssub.s32 %s22, %s34
      %s107 = sor.u32 %s105, %s106
      %p108 = scmp.eq.s32.totalorder %s107, 0
      %s110 = sadd.s32 %s109, 1
      %s111 = scalar_select %p108, %s109, %s110
      %p114 = pneg %p108
      %p115 = scmp.eq.s32.totalorder %s15, 3
      %p116 = por %p114, %p115
      %p117 = scmp.ne.s32.totalorder %s109, %s112
      %p118 = scmp.eq.s32.totalorder %s15, 0
      %p119 = por %p117, %p118
      %p120 = scmp.ne.s32.totalorder %s109, %s112
      %p121 = scmp.eq.s32.totalorder %s20, 3
      %p122 = por %p120, %p121
      %p123 = scmp.ne.s32.totalorder %s112, %s113
      %p124 = scmp.eq.s32.totalorder %s20, 0
      %p125 = por %p123, %p124
      %p126 = scmp.ne.s32.totalorder %s112, %s113
      %p127 = scmp.eq.s32.totalorder %s21, 3
      %p128 = por %p126, %p127
      %p130 = scmp.ne.s32.totalorder %s113, %s129
      %p131 = scmp.eq.s32.totalorder %s21, 0
      %p132 = por %p130, %p131
      %p133 = scmp.le.s32.totalorder 1, %s15
      %p134 = scmp.lt.s32.totalorder %s15, 5
      %p135 = pnand %p133, %p134
      %p136 = pneg %p135
      // Predicated region
      $region9: #{tpu_custom_call.1} parent=5 // pred_check
        _
      $region10: #{tpu_custom_call.1} parent=5 // pred_check_branch
        %138 = sbr.rel (%p135) target = $region12
      $region11: #{tpu_custom_call.1} parent=5 // pred_region
        %s139 = ssub.s32 %s15, 1
        // Predicated region
        $region13: #{tpu_custom_call.1} parent=11 // pred_check
          %p140 = pneg %p76
        $region14: #{tpu_custom_call.1} parent=11 // pred_check_branch
          %142 = sbr.rel (%p140) target = $region16
        $region15: #{tpu_custom_call.1} parent=11 // pred_region
          _
        $region16: #{tpu_custom_call.1} parent=11 // pred_fallthru
          _
        // Predicated region
        $region17: #{tpu_custom_call.1} parent=11 // pred_check
          %p143 = pneg %p97
        $region18: #{tpu_custom_call.1} parent=11 // pred_check_branch
          %145 = sbr.rel (%p143) target = $region20
        $region19: #{tpu_custom_call.1} parent=11 // pred_region
          _
        $region20: #{tpu_custom_call.1} parent=11 // pred_fallthru
          _
      $region12: #{tpu_custom_call.1} parent=5 // pred_fallthru
        _
      %p146 = scmp.lt.s32.totalorder %s15, 4
      // Predicated region
      $region21: #{tpu_custom_call.1} parent=5 // pred_check
        %p147 = pneg %p146
      $region22: #{tpu_custom_call.1} parent=5 // pred_check_branch
        %149 = sbr.rel (%p147) target = $region24
      $region23: #{tpu_custom_call.1} parent=5 // pred_region
        // Predicated region
        $region25: #{tpu_custom_call.1} parent=23 // pred_check
          %p150 = pneg %p49
        $region26: #{tpu_custom_call.1} parent=23 // pred_check_branch
          %152 = sbr.rel (%p150) target = $region28
        $region27: #{tpu_custom_call.1} parent=23 // pred_region
          %s153 = sand.u32 %s39, 1
          %s154 = scalar_lea.sflag [#allocation3], %s153
          %s155 = sand.u32 %s39, 1
          %s156 = smul.addr %s155, 32
          %s157 = scalar_lea.vmem [#allocation2], %s156
          %s158 = smul.u32 2, %s22
          %160 = vsyncadd %s154, 0
          %s161 = smul.addr %s23, 16
          %s162 = sadd.s32 %s158, %s161
          %s163 = smul.addr %s162, 4
          %s164 = scalar_lea.hbm %s0, %s163
          %s165 = sshll.u32 %s164, 4
          %s166 = int_to_ptr.hbm [resolvable:$true] %s165
          %s167 = sshll.u32 %s157, 4
          %s168 = int_to_ptr.vmem [resolvable:$true] %s167
          %173 = dma.hbm_to_vmem [thread:$0]  %s166, 512, %s168, %s154, 256, 128, 8
        $region28: #{tpu_custom_call.1} parent=23 // pred_fallthru
          _
      $region24: #{tpu_custom_call.1} parent=5 // pred_fallthru
        _
      %p174 = scmp.le.s32.totalorder 1, %s15
      %p175 = scmp.lt.s32.totalorder %s15, 5
      %p176 = pnand %p174, %p175
      %p177 = pneg %p176
      // Predicated region
      $region29: #{tpu_custom_call.1} parent=5 // pred_check
        _
      $region30: #{tpu_custom_call.1} parent=5 // pred_check_branch
        %179 = sbr.rel (%p176) target = $region32
      $region31: #{tpu_custom_call.1} parent=5 // pred_region
        %s180 = ssub.s32 %s15, 1
        %s181 = sand.u32 %s42, 1
        %s182 = scalar_lea.sflag [#allocation3], %s181
        %s183 = sand.u32 %s42, 1
        %s184 = smul.addr %s183, 32
        %s185 = scalar_lea.vmem [#allocation2], %s184
        // Predicated region
        $region33: #{tpu_custom_call.1} parent=31 // pred_check
          %p186 = pneg %p55
        $region34: #{tpu_custom_call.1} parent=31 // pred_check_branch
          %188 = sbr.rel (%p186) target = $region36
        $region35: #{tpu_custom_call.1} parent=31 // pred_region
          %190 = dma.done %s182, 512
        $region36: #{tpu_custom_call.1} parent=31 // pred_fallthru
          _
        %s191 = sand.u32 %s42, 1
        %s192 = scalar_lea.sflag [#allocation3], %s191
        %s193 = sand.u32 %s42, 1
        %s194 = smul.addr %s193, 32
        %s195 = scalar_lea.vmem [#allocation2], %s194
        %p196 = pneg %p55
        %p197 = pneg %p52
        %p198 = pneg %p76
        %p199 = pneg %p73
        %p200 = pneg %p97
        %p201 = pneg %p94
        %p202 = pneg %p125
        %p203 = pneg %p122
        %s204 = sand.u32 %s112, 1
        %s205 = scalar_lea.sflag [#allocation4], %s204
        %s206 = sand.u32 %s112, 1
        %s207 = smul.addr %s206, 64
        %s208 = scalar_lea.vmem [#allocation5], %s207
        %s209 = smul.u32 2, %s24
        %s210 = smul.u32 2, %s24
        %v212 = vld [vmem:[%s1] sm:$0xf]
        %v213 = vld [vmem:[%s1 + $0x4] sm:$0xf]
        %v214 = vld [vmem:[%s1 + $0x8] sm:$0xf]
        %v215 = vld [vmem:[%s1 + $0xc] sm:$0xf]
        %v216 = vld [vmem:[%s2] sm:$0xf]
        %v217 = vld [vmem:[%s2 + $0x4] sm:$0xf]
        %v218 = vld [vmem:[%s2 + $0x8] sm:$0xf]
        %v219 = vld [vmem:[%s2 + $0xc] sm:$0xf]
        %v220 = vld [vmem:[%s185] sm:$0xff]
        %v221 = vld [vmem:[%s185 + $0x8] sm:$0xff]
        %v222 = vld [vmem:[%s185 + $0x10] sm:$0xff]
        %v223 = vld [vmem:[%s185 + $0x18] sm:$0xff]
        %v224 = vunpack.c.l.bf16 %v216
        %v225 = vunpack.c.l.bf16 %v217
        %v226 = vunpack.c.l.bf16 %v218
        %v227 = vunpack.c.l.bf16 %v219
        %229 = vset.pattern.permute.xlu0 0
        %230 = vperm.xlu0 %229, %v224
        %v231 = vpop.permute.xlu0 %230
        %234 = vset.pattern.permute.xlu0 0
        %235 = vperm.xlu0 %234, %v225
        %v236 = vpop.permute.xlu0 %235
        %239 = vset.pattern.permute.xlu0 0
        %240 = vperm.xlu0 %239, %v226
        %v241 = vpop.permute.xlu0 %240
        %244 = vset.pattern.permute.xlu0 0
        %245 = vperm.xlu0 %244, %v227
        %v246 = vpop.permute.xlu0 %245
        %v252 = vunpack.c.l.b16 %v212
        %v253 = vunpack.c.l.b16 %v213
        %v254 = vunpack.c.l.b16 %v214
        %v255 = vunpack.c.l.b16 %v215
        %v256 = vpack.c.b16 %v253, %v252
        %v257 = vpack.c.b16 %v255, %v254
        %v262 = vunpack.c.l.b16 %v220
        %v263 = vunpack.c.h.b16 %v220
        %v264 = vunpack.c.l.b16 %v221
        %v265 = vunpack.c.h.b16 %v221
        %v266 = vunpack.c.l.b16 %v222
        %v267 = vunpack.c.h.b16 %v222
        %v268 = vunpack.c.l.b16 %v223
        %v269 = vunpack.c.h.b16 %v223
        %v270 = vpack.c.b16 %v264, %v262
        %v271 = vpack.c.b16 %v265, %v263
        %v272 = vpack.c.b16 %v268, %v266
        %v273 = vpack.c.b16 %v269, %v267
        %vm278 = vcmask 261120
        %v280 = vsel %vm278, %v256, 0
        %v283 = vsel %vm278, %v257, 0
        %285 = vmatpush.bf16.msra.mxu0 0
        %286 = vmatpush.bf16.msra.mxu0 0
        %287 = vmatpush.bf16.msra.mxu0 0
        %288 = vmatpush.bf16.msra.mxu0 0
        %289 = vmatpush.bf16.msra.mxu0 0
        %290 = vmatpush.bf16.msra.mxu0 0
        %291 = vmatpush.bf16.msra.mxu0 %v272
        %292 = vmatpush.bf16.msra.mxu0 %v270
        %293 = vmatmul.bf16.gmra.mxu0 %v280
        %v294 = vpop.f32.mrf.mxu0
        %v295 = vadd.f32 %v231, %v294
        %v296 = vpop.f32.mrf.mxu0
        %v297 = vadd.f32 %v236, %v296
        %298 = vmatmul.bf16.gmra.mxu0 %v283
        %v299 = vpop.f32.mrf.mxu0
        %v300 = vadd.f32 %v241, %v299
        %v301 = vpop.f32.mrf.mxu0
        %v302 = vadd.f32 %v246, %v301
        %303 = vdwg.mxu0
        %304 = vmatpush.bf16.msra.mxu0 0
        %305 = vmatpush.bf16.msra.mxu0 0
        %306 = vmatpush.bf16.msra.mxu0 0
        %307 = vmatpush.bf16.msra.mxu0 0
        %308 = vmatpush.bf16.msra.mxu0 0
        %309 = vmatpush.bf16.msra.mxu0 0
        %310 = vmatpush.bf16.msra.mxu0 %v273
        %311 = vmatpush.bf16.msra.mxu0 %v271
        %312 = vmatmul.bf16.gmra.mxu0 %v280
        %v313 = vpop.f32.mrf.mxu0
        %v314 = vadd.f32 %v231, %v313
        %v315 = vpop.f32.mrf.mxu0
        %v316 = vadd.f32 %v236, %v315
        %317 = vmatmul.bf16.gmra.mxu0 %v283
        %v318 = vpop.f32.mrf.mxu0
        %v319 = vadd.f32 %v241, %v318
        %v320 = vpop.f32.mrf.mxu0
        %v321 = vadd.f32 %v246, %v320
        %322 = vdwg.mxu0
        %v323 = vmax.f32 %v295, 0.0
        %v324 = vmax.f32 %v314, 0.0
        %v325 = vmax.f32 %v297, 0.0
        %v326 = vmax.f32 %v316, 0.0
        %v327 = vmax.f32 %v300, 0.0
        %v328 = vmax.f32 %v319, 0.0
        %v329 = vmax.f32 %v302, 0.0
        %v330 = vmax.f32 %v321, 0.0
        %331 = vst [vmem:[%s208] sm:$0xff] %v323
        %332 = vst [vmem:[%s208 + $0x8] sm:$0xff] %v324
        %333 = vst [vmem:[%s208 + $0x10] sm:$0xff] %v325
        %334 = vst [vmem:[%s208 + $0x18] sm:$0xff] %v326
        %335 = vst [vmem:[%s208 + $0x20] sm:$0xff] %v327
        %336 = vst [vmem:[%s208 + $0x28] sm:$0xff] %v328
        %337 = vst [vmem:[%s208 + $0x30] sm:$0xff] %v329
        %338 = vst [vmem:[%s208 + $0x38] sm:$0xff] %v330
        %s339 = sand.u32 %s112, 1
        %s340 = scalar_lea.sflag [#allocation4], %s339
        %s341 = sand.u32 %s112, 1
        %s342 = smul.addr %s341, 64
        %s343 = scalar_lea.vmem [#allocation5], %s342
        // Predicated region
        $region37: #{tpu_custom_call.1} parent=31 // pred_check
          %p344 = pneg %p122
        $region38: #{tpu_custom_call.1} parent=31 // pred_check_branch
          %346 = sbr.rel (%p344) target = $region40
        $region39: #{tpu_custom_call.1} parent=31 // pred_region
          %s347 = smul.u32 2, %s24
          %349 = vsyncadd %s340, 0
          %s350 = smul.addr %s25, 16
          %s351 = sadd.s32 %s347, %s350
          %s352 = smul.addr %s351, 8
          %s353 = scalar_lea.hbm %s3, %s352
          %s354 = sshll.u32 %s343, 4
          %s355 = int_to_ptr.vmem [resolvable:$true] %s354
          %s356 = sshll.u32 %s353, 4
          %s357 = int_to_ptr.hbm [resolvable:$true] %s356
          %362 = dma.vmem_to_hbm [thread:$0]  %s355, 1024, %s357, %s340, 256, 512, 16
        $region40: #{tpu_custom_call.1} parent=31 // pred_fallthru
          _
      $region32: #{tpu_custom_call.1} parent=5 // pred_fallthru
        _
      %p363 = scmp.le.s32.totalorder 2, %s15
      // Predicated region
      $region41: #{tpu_custom_call.1} parent=5 // pred_check
        %p364 = pneg %p363
      $region42: #{tpu_custom_call.1} parent=5 // pred_check_branch
        %366 = sbr.rel (%p364) target = $region44
      $region43: #{tpu_custom_call.1} parent=5 // pred_region
        %s367 = ssub.s32 %s15, 2
        // Predicated region
        $region45: #{tpu_custom_call.1} parent=43 // pred_check
          %p368 = pneg %p128
        $region46: #{tpu_custom_call.1} parent=43 // pred_check_branch
          %370 = sbr.rel (%p368) target = $region48
        $region47: #{tpu_custom_call.1} parent=43 // pred_region
          %s371 = sand.u32 %s113, 1
          %s372 = scalar_lea.sflag [#allocation4], %s371
          %s373 = sand.u32 %s113, 1
          %s374 = smul.addr %s373, 64
          %s375 = scalar_lea.vmem [#allocation5], %s374
          %377 = dma.done %s372, 1024
        $region48: #{tpu_custom_call.1} parent=43 // pred_fallthru
          _
      $region44: #{tpu_custom_call.1} parent=5 // pred_fallthru
        _
    $region6: #{tpu_custom_call.1} parent=1 // loop_footer
      %s19 = sadd.s32 1, %s15
    $region7: #{tpu_custom_call.1} parent=1 // loop_footer_branch
      %14 = sbr.rel target = $region3
    $region8: #{tpu_custom_call.1} parent=1 // loop_exit
      _
    %378 = vsyncpa [#allocation3], 1
    %s379 = scalar_lea.sflag [#allocation3], 1
    %380 = vsyncpa %s379, 1
    %381 = vsyncpa [#allocation4], 1
    %s382 = scalar_lea.sflag [#allocation4], 1
    %383 = vsyncpa %s382, 1

</llo_original>
